<compile_context>
chip_gen: v7x
topology: tpu7x:2x2x1
jax: 0.10.0
libtpu: 0.0.40
codegen_flags: <defaults>
</compile_context>

<pallas_src>
import functools
import math

import jax
import jax.numpy as jnp
import numpy as np
from jax.experimental import pallas as pl
from jax.experimental.pallas import tpu as pltpu


# ----------------------------------------------------------------------------
# Init-time filter-bank construction (mirrors SincConv.__init__, NumPy port).
# ----------------------------------------------------------------------------
# TODO(synk): `opts.windowing` is a module-level global in the original code;
# we default to 'hamming' (the first / canonical branch).
def make_sinc_filters(N_filt, Filt_dim, fs, windowing="hamming"):
    fs = float(fs)
    low_freq_mel = 80.0
    high_freq_mel = 2595.0 * np.log10(1.0 + fs / 2.0 / 700.0)
    mel_points = np.linspace(low_freq_mel, high_freq_mel, N_filt)
    f_cos = 700.0 * (10.0 ** (mel_points / 2595.0) - 1.0)
    b1 = np.roll(f_cos, 1)
    b2 = np.roll(f_cos, -1)
    b1[0] = 30.0
    b2[-1] = fs / 2.0 - 100.0
    freq_scale = fs
    filt_b1 = np.abs(b1 / freq_scale)
    filt_band = np.abs((b2 - b1) / freq_scale)

    n_half = int((Filt_dim - 1) / 2)
    t_right = np.linspace(1.0, (Filt_dim - 1) / 2.0, n_half) / fs
    n = np.linspace(0.0, float(Filt_dim), Filt_dim)

    min_freq, min_band = 50.0, 50.0
    filt_beg = filt_b1 + min_freq / freq_scale
    filt_end = filt_beg + (filt_band + min_band / freq_scale)

    c2 = np.cos(2.0 * math.pi * n / Filt_dim)
    if windowing == "hamming":
        window = 0.54 - 0.46 * c2
    elif windowing == "hann":
        window = 0.5 * (1.0 - c2)
    elif windowing == "blackman":
        window = 0.42 - 0.5 * c2 + 0.08 * np.cos(4.0 * math.pi * n / Filt_dim)
    else:
        raise ValueError(f"unsupported windowing: {windowing}")

    def sinc_filter(band_norm):
        band_hz = band_norm * freq_scale
        arg = 2.0 * math.pi * band_hz * t_right
        y_right = np.sin(arg) / arg
        return np.concatenate([y_right[::-1], np.ones(1), y_right])

    filters = np.zeros((N_filt, Filt_dim), np.float64)
    for i in range(N_filt):
        lp1 = 2.0 * filt_beg[i] * sinc_filter(filt_beg[i])
        lp2 = 2.0 * filt_end[i] * sinc_filter(filt_end[i])
        bp = lp2 - lp1
        bp = bp / np.max(bp)
        filters[i, :] = bp * window
    return jnp.asarray(filters, jnp.float32)


# ----------------------------------------------------------------------------
# Pallas kernel: one (batch, time-tile) grid step.
#   f_ref  : (N_pad, K_pad)   zero-padded filter bank (resident, constant block)
#   xc_ref : (1, 1, tile_t)   channel-summed signal, current time tile
#   xn_ref : (1, 1, tile_t)   channel-summed signal, next time tile (halo)
#   o_ref  : (1, N_pad, tile_t)
# ----------------------------------------------------------------------------
def _sinc_conv_kernel(f_ref, xc_ref, xn_ref, o_ref, *, tile_t, k_pad):
    # Current + next tile -> one lane-dense row covering the K-1 halo.
    xs = jnp.concatenate([xc_ref[0], xn_ref[0]], axis=-1)          # (1, 2*tile_t)

    # im2col: row k is xs shifted left by k samples. Built once per tile with
    # static lane shifts (XLU work, overlaps with the MXU in separate slots).
    mat = jnp.concatenate(
        [xs[:, k:k + tile_t] for k in range(k_pad)], axis=0)       # (k_pad, tile_t)

    # All MACs on the MXU: (N_pad, K_pad) x (K_pad, tile_t) -> (N_pad, tile_t).
    o_ref[0] = jnp.dot(f_ref[...], mat, preferred_element_type=jnp.float32)


# ----------------------------------------------------------------------------
# Wrapper: padding, channel pre-sum, tiling, pallas_call.
# ----------------------------------------------------------------------------
def sinc_conv_pallas(x, filters, *, stride=1, padding=True, tile_T=None):
    """Forward pass of SincConv.

    `padding` has the constructor's meaning: True -> 'VALID' (no pad, module
    default), False -> reflect pad with (K//2 - (stride>1), K//2).
    """
    # TODO(synk): stride > 1 needs a strided-output path; the module default
    # (stride=1) is implemented.
    assert stride == 1, "stride > 1 not implemented in the Pallas path"

    B, C_in, T = x.shape
    N_filt, Filt_dim = filters.shape
    x = x.astype(jnp.float32)
    filters = filters.astype(jnp.float32)

    if not padding:  # ctor padding=False -> self.padding=True -> reflect pad
        P1 = Filt_dim // 2 - int(stride > 1)
        P2 = Filt_dim // 2
        x = jnp.pad(x, ((0, 0), (0, 0), (P1, P2)), mode="reflect")

    Tp = x.shape[-1]
    T_out = (Tp - Filt_dim) // stride + 1
    assert T_out > 0

    # conv1d with channel-repeated weights == conv of the channel sum.
    x_sum = jnp.sum(x, axis=1)                                   # (B, Tp)

    if tile_T is None:
        tile_T = min(2048, 128 * pl.cdiv(T_out, 128))
    assert tile_T % 128 == 0
    n_tiles = pl.cdiv(T_out, tile_T)
    T_out_pad = n_tiles * tile_T

    # Pad filter taps to a sublane multiple (zero taps -> no effect on result)
    # and N_filt to a multiple of 8 so the output store stays unmasked.
    K_pad = 8 * pl.cdiv(Filt_dim, 8)
    N_pad = 8 * pl.cdiv(N_filt, 8)
    f_pad = jnp.pad(filters, ((0, N_pad - N_filt), (0, K_pad - Filt_dim)))

    # Zero-pad time to (n_tiles + 1) whole tiles so the "next tile" halo fetch
    # of the last grid step is always in bounds. Extra samples only feed
    # zero filter taps or output positions >= T_out (sliced off below).
    Tp_need = (n_tiles + 1) * tile_T
    x_sum = jnp.pad(x_sum, ((0, 0), (0, Tp_need - Tp)))
    x_sum = x_sum.reshape(B, 1, Tp_need)

    kernel = functools.partial(_sinc_conv_kernel, tile_t=tile_T, k_pad=K_pad)

    cost = pl.CostEstimate(
        flops=2 * B * N_pad * K_pad * T_out_pad,
        transcendentals=0,
        bytes_accessed=4 * (2 * B * Tp_need + N_pad * K_pad
                            + B * N_pad * T_out_pad),
    )

    out = pl.pallas_call(
        kernel,
        out_shape=jax.ShapeDtypeStruct((B, N_pad, T_out_pad), jnp.float32),
        grid_spec=pltpu.PrefetchScalarGridSpec(
            num_scalar_prefetch=0,
            grid=(B, n_tiles),
            in_specs=[
                # Filter bank: constant block, stays resident in VMEM.
                pl.BlockSpec((N_pad, K_pad), lambda b, j: (0, 0)),
                # Channel-summed signal: current tile ...
                pl.BlockSpec((1, 1, tile_T), lambda b, j: (b, 0, j)),
                # ... and the next tile (provides the K-1 halo); both are
                # ordinary blocked specs, so Pallas auto double-buffers them.
                pl.BlockSpec((1, 1, tile_T), lambda b, j: (b, 0, j + 1)),
            ],
            out_specs=pl.BlockSpec((1, N_pad, tile_T), lambda b, j: (b, 0, j)),
        ),
        compiler_params=pltpu.CompilerParams(
            dimension_semantics=("parallel", "parallel")),
        cost_estimate=cost,
    )(f_pad, x_sum, x_sum)

    return out[:, :N_filt, :T_out]


# ----------------------------------------------------------------------------
# Pure-JAX reference (independent path through lax.conv_general_dilated).
# ----------------------------------------------------------------------------
def sinc_conv_ref(x, filters, *, stride=1, padding=True):
    B, C_in, T = x.shape
    N_filt, Filt_dim = filters.shape
    x = x.astype(jnp.float32)
    if not padding:
        P1 = Filt_dim // 2 - int(stride > 1)
        P2 = Filt_dim // 2
        x = jnp.pad(x, ((0, 0), (0, 0), (P1, P2)), mode="reflect")
    w = jnp.broadcast_to(filters[:, None, :], (N_filt, C_in, Filt_dim))
    return jax.lax.conv_general_dilated(
        x, w, window_strides=(stride,), padding="VALID",
        dimension_numbers=("NCH", "OIH", "NCH"))


if __name__ == "__main__":
    # Small shapes consistent with the module: waveform batch (B, C_in, T),
    # N_filt sinc filters of length Filt_dim, fs = 16 kHz.
    B, C_in, T = 2, 4, 256
    N_filt, Filt_dim, fs = 32, 17, 16000
    stride = 1

    filters = make_sinc_filters(N_filt, Filt_dim, fs)

    key = jax.random.PRNGKey(0)
    x = jax.random.normal(key, (B, C_in, T), jnp.float32)

    # padding=True  -> 'VALID' (module default, no pad)
    # padding=False -> reflect pad, output length == T for stride=1
    for padding in (True, False):
        for tile in (128, None):   # small explicit tile (multi-tile halo) + default
            out = sinc_conv_pallas(x, filters, stride=stride, padding=padding,
                                   tile_T=tile)
            out = jax.block_until_ready(out)
            ref = sinc_conv_ref(x, filters, stride=stride, padding=padding)
            np.testing.assert_allclose(np.asarray(out), np.asarray(ref),
                                       rtol=1e-4, atol=1e-4)

    print("KERNEL_OK")
</pallas_src>

<mosaic_0001>
module attributes {stable_mosaic.version = 11 : i64} {
  func.func @_sinc_conv_kernel(%arg0: i32, %arg1: i32, %arg2: memref<32x24xf32, #tpu.memory_space<vmem>>, %arg3: memref<1x1x128xf32, #tpu.memory_space<vmem>>, %arg4: memref<1x1x128xf32, #tpu.memory_space<vmem>>, %arg5: memref<1x32x128xf32, #tpu.memory_space<vmem>>) attributes {dimension_semantics = [#tpu.dimension_semantics<parallel>, #tpu.dimension_semantics<parallel>], iteration_bounds = array<i64: 2, 2>, scalar_prefetch = 0 : i64, scratch_operands = 0 : i64, tpu.core_type = #tpu.core_type<tc>, window_params = [{pipeline_mode = #tpu.pipeline_mode<synchronous>, transform_indices = @transform_0, window_bounds = array<i64: 32, 24>}, {transform_indices = @transform_1, window_bounds = array<i64: 1, 1, 128>}, {transform_indices = @transform_2, window_bounds = array<i64: 1, 1, 128>}, {transform_indices = @transform_3, window_bounds = array<i64: 1, 32, 128>}]} {
    %c0 = arith.constant 0 : index
    %c0_0 = arith.constant 0 : index
    %c0_1 = arith.constant 0 : index
    %0 = vector.load %arg3[%c0, %c0_0, %c0_1] : memref<1x1x128xf32, #tpu.memory_space<vmem>>, vector<1x1x128xf32>
    %1 = vector.shape_cast %0 : vector<1x1x128xf32> to vector<1x128xf32>
    %c0_2 = arith.constant 0 : index
    %c0_3 = arith.constant 0 : index
    %c0_4 = arith.constant 0 : index
    %2 = vector.load %arg4[%c0_2, %c0_3, %c0_4] : memref<1x1x128xf32, #tpu.memory_space<vmem>>, vector<1x1x128xf32>
    %3 = vector.shape_cast %2 : vector<1x1x128xf32> to vector<1x128xf32>
    %4 = tpu.concatenate %1, %3 in 1 : vector<1x128xf32>, vector<1x128xf32> -> vector<1x256xf32>
    %5 = vector.extract_strided_slice %4 {offsets = [0, 0], sizes = [1, 128], strides = [1, 1]} : vector<1x256xf32> to vector<1x128xf32>
    %6 = vector.extract_strided_slice %4 {offsets = [0, 1], sizes = [1, 128], strides = [1, 1]} : vector<1x256xf32> to vector<1x128xf32>
    %7 = vector.extract_strided_slice %4 {offsets = [0, 2], sizes = [1, 128], strides = [1, 1]} : vector<1x256xf32> to vector<1x128xf32>
    %8 = vector.extract_strided_slice %4 {offsets = [0, 3], sizes = [1, 128], strides = [1, 1]} : vector<1x256xf32> to vector<1x128xf32>
    %9 = vector.extract_strided_slice %4 {offsets = [0, 4], sizes = [1, 128], strides = [1, 1]} : vector<1x256xf32> to vector<1x128xf32>
    %10 = vector.extract_strided_slice %4 {offsets = [0, 5], sizes = [1, 128], strides = [1, 1]} : vector<1x256xf32> to vector<1x128xf32>
    %11 = vector.extract_strided_slice %4 {offsets = [0, 6], sizes = [1, 128], strides = [1, 1]} : vector<1x256xf32> to vector<1x128xf32>
    %12 = vector.extract_strided_slice %4 {offsets = [0, 7], sizes = [1, 128], strides = [1, 1]} : vector<1x256xf32> to vector<1x128xf32>
    %13 = vector.extract_strided_slice %4 {offsets = [0, 8], sizes = [1, 128], strides = [1, 1]} : vector<1x256xf32> to vector<1x128xf32>
    %14 = vector.extract_strided_slice %4 {offsets = [0, 9], sizes = [1, 128], strides = [1, 1]} : vector<1x256xf32> to vector<1x128xf32>
    %15 = vector.extract_strided_slice %4 {offsets = [0, 10], sizes = [1, 128], strides = [1, 1]} : vector<1x256xf32> to vector<1x128xf32>
    %16 = vector.extract_strided_slice %4 {offsets = [0, 11], sizes = [1, 128], strides = [1, 1]} : vector<1x256xf32> to vector<1x128xf32>
    %17 = vector.extract_strided_slice %4 {offsets = [0, 12], sizes = [1, 128], strides = [1, 1]} : vector<1x256xf32> to vector<1x128xf32>
    %18 = vector.extract_strided_slice %4 {offsets = [0, 13], sizes = [1, 128], strides = [1, 1]} : vector<1x256xf32> to vector<1x128xf32>
    %19 = vector.extract_strided_slice %4 {offsets = [0, 14], sizes = [1, 128], strides = [1, 1]} : vector<1x256xf32> to vector<1x128xf32>
    %20 = vector.extract_strided_slice %4 {offsets = [0, 15], sizes = [1, 128], strides = [1, 1]} : vector<1x256xf32> to vector<1x128xf32>
    %21 = vector.extract_strided_slice %4 {offsets = [0, 16], sizes = [1, 128], strides = [1, 1]} : vector<1x256xf32> to vector<1x128xf32>
    %22 = vector.extract_strided_slice %4 {offsets = [0, 17], sizes = [1, 128], strides = [1, 1]} : vector<1x256xf32> to vector<1x128xf32>
    %23 = vector.extract_strided_slice %4 {offsets = [0, 18], sizes = [1, 128], strides = [1, 1]} : vector<1x256xf32> to vector<1x128xf32>
    %24 = vector.extract_strided_slice %4 {offsets = [0, 19], sizes = [1, 128], strides = [1, 1]} : vector<1x256xf32> to vector<1x128xf32>
    %25 = vector.extract_strided_slice %4 {offsets = [0, 20], sizes = [1, 128], strides = [1, 1]} : vector<1x256xf32> to vector<1x128xf32>
    %26 = vector.extract_strided_slice %4 {offsets = [0, 21], sizes = [1, 128], strides = [1, 1]} : vector<1x256xf32> to vector<1x128xf32>
    %27 = vector.extract_strided_slice %4 {offsets = [0, 22], sizes = [1, 128], strides = [1, 1]} : vector<1x256xf32> to vector<1x128xf32>
    %28 = vector.extract_strided_slice %4 {offsets = [0, 23], sizes = [1, 128], strides = [1, 1]} : vector<1x256xf32> to vector<1x128xf32>
    %29 = tpu.concatenate %5, %6, %7, %8, %9, %10, %11, %12, %13, %14, %15, %16, %17, %18, %19, %20 in 0 : vector<1x128xf32>, vector<1x128xf32>, vector<1x128xf32>, vector<1x128xf32>, vector<1x128xf32>, vector<1x128xf32>, vector<1x128xf32>, vector<1x128xf32>, vector<1x128xf32>, vector<1x128xf32>, vector<1x128xf32>, vector<1x128xf32>, vector<1x128xf32>, vector<1x128xf32>, vector<1x128xf32>, vector<1x128xf32> -> vector<16x128xf32>
    %30 = tpu.concatenate %21, %22, %23, %24, %25, %26, %27, %28 in 0 : vector<1x128xf32>, vector<1x128xf32>, vector<1x128xf32>, vector<1x128xf32>, vector<1x128xf32>, vector<1x128xf32>, vector<1x128xf32>, vector<1x128xf32> -> vector<8x128xf32>
    %31 = tpu.concatenate %29, %30 in 0 : vector<16x128xf32>, vector<8x128xf32> -> vector<24x128xf32>
    %c0_5 = arith.constant 0 : index
    %c0_6 = arith.constant 0 : index
    %32 = vector.load %arg2[%c0_5, %c0_6] : memref<32x24xf32, #tpu.memory_space<vmem>>, vector<32x24xf32>
    %cst = arith.constant dense<0.000000e+00> : vector<32x128xf32>
    %33 = tpu.matmul %32, %31, %cst {dimension_numbers = #tpu.dot_dimension_numbers<[1], [0], [0], [1], [0, 0, 1, 1], [], []>} : vector<32x24xf32>, vector<24x128xf32>, vector<32x128xf32> -> vector<32x128xf32>
    %c0_7 = arith.constant 0 : index
    %c0_8 = arith.constant 0 : index
    %c0_9 = arith.constant 0 : index
    %34 = vector.load %arg5[%c0_7, %c0_8, %c0_9] : memref<1x32x128xf32, #tpu.memory_space<vmem>>, vector<1x32x128xf32>
    %35 = vector.shape_cast %34 : vector<1x32x128xf32> to vector<32x128xf32>
    %36 = vector.shape_cast %33 : vector<32x128xf32> to vector<1x32x128xf32>
    tpu.vector_store %arg5[%c0_7, %c0_8, %c0_9], %36 {strides = array<i32>} : memref<1x32x128xf32, #tpu.memory_space<vmem>>, vector<1x32x128xf32>,
    return
  }
  func.func @transform_0(%arg0: i32, %arg1: i32) -> (i32, i32) {
    %c0_i32 = arith.constant 0 : i32
    %c0_i32_0 = arith.constant 0 : i32
    %c0_i32_1 = arith.constant 0 : i32
    return %c0_i32, %c0_i32_0 : i32, i32
  }
  func.func @transform_1(%arg0: i32, %arg1: i32) -> (i32, i32, i32) {
    %c0_i32 = arith.constant 0 : i32
    %c0_i32_0 = arith.constant 0 : i32
    return %arg0, %c0_i32, %arg1 : i32, i32, i32
  }
  func.func @transform_2(%arg0: i32, %arg1: i32) -> (i32, i32, i32) {
    %c1_i32 = arith.constant 1 : i32
    %0 = arith.addi %arg1, %c1_i32 : i32
    %c0_i32 = arith.constant 0 : i32
    %c0_i32_0 = arith.constant 0 : i32
    return %arg0, %c0_i32, %0 : i32, i32, i32
  }
  func.func @transform_3(%arg0: i32, %arg1: i32) -> (i32, i32, i32) {
    %c0_i32 = arith.constant 0 : i32
    %c0_i32_0 = arith.constant 0 : i32
    return %arg0, %c0_i32, %arg1 : i32, i32, i32
  }
}

</mosaic_0001>

<llo_original>
// kernel: tpu_custom_call.1
$region0: #{tpu_custom_call.1}
  #allocation0 [shape = 'u32[]', space=smem, size = 0x4, offset = 0x4, fixed_abs, tag = 'smem constant byte address 0x4 - core index']
  #allocation1 [shape = 'u32[144,128]{1,0:T(1,128)}', space=vmem, size = 0x12000, scoped, tag = 'internal scratch']
  %s0 = inlined_call_operand.vmem [shape: f32[32,24], index: 0, kind: input, shape index: {}]
  %s1 = inlined_call_operand.vmem [shape: f32[2,1,384], index: 1, kind: input, shape index: {}]
  %s2 = inlined_call_operand.vmem [shape: f32[2,1,384], index: 2, kind: input, shape index: {}]
  %s3 = inlined_call_operand.hbm [shape: f32[2,32,256], index: 3, kind: output, shape index: {}]
  %s4 = sld [smem:[#allocation0]]
  $region45: #{tpu_custom_call.1} parent=0
    _
  %s6 = ssub.s32 1, %s4
  %s7 = scalar_select 0, %s6, %s4
  $region1: #{tpu_custom_call.1} parent=0
    #allocation2 [shape = 'u8[32768]{0}', space=vmem, size = 0x8000, scoped, tag = 'output window, operand 0']
    #allocation3 [shape = 's32[2]{0}', space=sflag, size = 0x8, scoped, tag = 'scoped memory for tpu_custom_call.1']
    %8 = vsyncpa [#allocation3], 0
    %s9 = scalar_lea.sflag [#allocation3], 1
    %10 = vsyncpa %s9, 0
    loop: start=0, step=1, limit=6
    $region2: #{tpu_custom_call.1} parent=1 // loop_pre_header
      _
    $region3: #{tpu_custom_call.1} parent=1 // loop_header
      %s12 = sphi 0, %s16
      %p13 = scmp.ge.s32.totalorder %s12, 6
      %s19 = sphi 0, %s31
      %s20 = sphi 0, %s27
      %s21 = sphi 0, %s19
      %s22 = sphi 0, %s20
      %s23 = sphi 0, %s21
      %s24 = sphi 0, %s22
      %s32 = sphi 0, %s32
      %s34 = sphi 0, %s32
      %s35 = sphi 0, %s34
      %s49 = sphi 0, %s35
      %s57 = sphi 0, %s59
      %s60 = sphi 0, %s57
      %s61 = sphi 0, %s60
      %s77 = sphi 0, %s61
      %s87 = sphi 0, %s89
      %s90 = sphi 0, %s87
      %s91 = sphi 0, %s90
      %s107 = sphi 0, %s91
      %s115 = sphi 0, %s117
      %s118 = sphi 0, %s115
      %s119 = sphi 0, %s118
      %s135 = sphi 0, %s119
    $region4: #{tpu_custom_call.1} parent=1 // loop_header_branch
      %15 = sbr.rel (%p13) target = $region8
    $region5: #{tpu_custom_call.1} parent=1 // loop_body
      %s17 = ssub.s32 %s12, 1
      %s18 = ssub.s32 %s12, 2
      %s25 = sadd.s32 1, %s20
      %p26 = scmp.ge.s32.totalorder %s25, 2
      %s27 = scalar_select %p26, 0, %s25
      %s28 = sadd.s32 1, %s19
      %s29 = scalar_select %p26, %s28, %s19
      %p30 = scmp.ge.s32.totalorder %s29, 2
      %s31 = scalar_select %p30, 0, %s29
      %s33 = sadd.s32 %s32, 1
      %p36 = scmp.eq.s32.totalorder %s12, 3
      %p37 = scmp.ne.s32.totalorder %s32, %s34
      %p38 = scmp.eq.s32.totalorder %s12, 0
      %p39 = por %p37, %p38
      %p40 = scmp.ne.s32.totalorder %s32, %s34
      %p41 = scmp.eq.s32.totalorder %s17, 3
      %p42 = por %p40, %p41
      %p43 = scmp.ne.s32.totalorder %s34, %s35
      %p44 = scmp.eq.s32.totalorder %s17, 0
      %p45 = por %p43, %p44
      %p46 = scmp.ne.s32.totalorder %s34, %s35
      %p47 = scmp.eq.s32.totalorder %s18, 3
      %p48 = por %p46, %p47
      %p50 = scmp.ne.s32.totalorder %s35, %s49
      %p51 = scmp.eq.s32.totalorder %s18, 0
      %p52 = por %p50, %p51
      %s53 = ssub.s32 %s19, %s31
      %s54 = ssub.s32 %s20, %s27
      %s55 = sor.u32 %s53, %s54
      %p56 = scmp.eq.s32.totalorder %s55, 0
      %s58 = sadd.s32 %s57, 1
      %s59 = scalar_select %p56, %s57, %s58
      %p62 = pneg %p56
      %p63 = scmp.eq.s32.totalorder %s12, 3
      %p64 = por %p62, %p63
      %p65 = scmp.ne.s32.totalorder %s57, %s60
      %p66 = scmp.eq.s32.totalorder %s12, 0
      %p67 = por %p65, %p66
      %p68 = scmp.ne.s32.totalorder %s57, %s60
      %p69 = scmp.eq.s32.totalorder %s17, 3
      %p70 = por %p68, %p69
      %p71 = scmp.ne.s32.totalorder %s60, %s61
      %p72 = scmp.eq.s32.totalorder %s17, 0
      %p73 = por %p71, %p72
      %p74 = scmp.ne.s32.totalorder %s60, %s61
      %p75 = scmp.eq.s32.totalorder %s18, 3
      %p76 = por %p74, %p75
      %p78 = scmp.ne.s32.totalorder %s61, %s77
      %p79 = scmp.eq.s32.totalorder %s18, 0
      %p80 = por %p78, %p79
      %s81 = sadd.s32 %s20, 1
      %s82 = sadd.s32 %s27, 1
      %s83 = ssub.s32 %s19, %s31
      %s84 = ssub.s32 %s81, %s82
      %s85 = sor.u32 %s83, %s84
      %p86 = scmp.eq.s32.totalorder %s85, 0
      %s88 = sadd.s32 %s87, 1
      %s89 = scalar_select %p86, %s87, %s88
      %p92 = pneg %p86
      %p93 = scmp.eq.s32.totalorder %s12, 3
      %p94 = por %p92, %p93
      %p95 = scmp.ne.s32.totalorder %s87, %s90
      %p96 = scmp.eq.s32.totalorder %s12, 0
      %p97 = por %p95, %p96
      %p98 = scmp.ne.s32.totalorder %s87, %s90
      %p99 = scmp.eq.s32.totalorder %s17, 3
      %p100 = por %p98, %p99
      %p101 = scmp.ne.s32.totalorder %s90, %s91
      %p102 = scmp.eq.s32.totalorder %s17, 0
      %p103 = por %p101, %p102
      %p104 = scmp.ne.s32.totalorder %s90, %s91
      %p105 = scmp.eq.s32.totalorder %s18, 3
      %p106 = por %p104, %p105
      %p108 = scmp.ne.s32.totalorder %s91, %s107
      %p109 = scmp.eq.s32.totalorder %s18, 0
      %p110 = por %p108, %p109
      %s111 = ssub.s32 %s19, %s31
      %s112 = ssub.s32 %s20, %s27
      %s113 = sor.u32 %s111, %s112
      %p114 = scmp.eq.s32.totalorder %s113, 0
      %s116 = sadd.s32 %s115, 1
      %s117 = scalar_select %p114, %s115, %s116
      %p120 = pneg %p114
      %p121 = scmp.eq.s32.totalorder %s12, 3
      %p122 = por %p120, %p121
      %p123 = scmp.ne.s32.totalorder %s115, %s118
      %p124 = scmp.eq.s32.totalorder %s12, 0
      %p125 = por %p123, %p124
      %p126 = scmp.ne.s32.totalorder %s115, %s118
      %p127 = scmp.eq.s32.totalorder %s17, 3
      %p128 = por %p126, %p127
      %p129 = scmp.ne.s32.totalorder %s118, %s119
      %p130 = scmp.eq.s32.totalorder %s17, 0
      %p131 = por %p129, %p130
      %p132 = scmp.ne.s32.totalorder %s118, %s119
      %p133 = scmp.eq.s32.totalorder %s18, 3
      %p134 = por %p132, %p133
      %p136 = scmp.ne.s32.totalorder %s119, %s135
      %p137 = scmp.eq.s32.totalorder %s18, 0
      %p138 = por %p136, %p137
      %p139 = scmp.le.s32.totalorder 1, %s12
      %p140 = scmp.lt.s32.totalorder %s12, 5
      %p141 = pnand %p139, %p140
      %p142 = pneg %p141
      // Predicated region
      $region9: #{tpu_custom_call.1} parent=5 // pred_check
        _
      $region10: #{tpu_custom_call.1} parent=5 // pred_check_branch
        %144 = sbr.rel (%p141) target = $region12
      $region11: #{tpu_custom_call.1} parent=5 // pred_region
        %s145 = ssub.s32 %s12, 1
        // Predicated region
        $region13: #{tpu_custom_call.1} parent=11 // pred_check
          %p146 = pneg %p45
        $region14: #{tpu_custom_call.1} parent=11 // pred_check_branch
          %148 = sbr.rel (%p146) target = $region16
        $region15: #{tpu_custom_call.1} parent=11 // pred_region
          _
        $region16: #{tpu_custom_call.1} parent=11 // pred_fallthru
          _
      $region12: #{tpu_custom_call.1} parent=5 // pred_fallthru
        _
      %p149 = scmp.lt.s32.totalorder %s12, 4
      // Predicated region
      $region17: #{tpu_custom_call.1} parent=5 // pred_check
        %p150 = pneg %p149
      $region18: #{tpu_custom_call.1} parent=5 // pred_check_branch
        %152 = sbr.rel (%p150) target = $region20
      $region19: #{tpu_custom_call.1} parent=5 // pred_region
        // Predicated region
        $region21: #{tpu_custom_call.1} parent=19 // pred_check
          %p153 = pneg %p67
        $region22: #{tpu_custom_call.1} parent=19 // pred_check_branch
          %155 = sbr.rel (%p153) target = $region24
        $region23: #{tpu_custom_call.1} parent=19 // pred_region
          %p156 = scmp.lt.s32.totalorder %s19, 1
          %s157 = scalar_select %p156, %s19, 1
          %p158 = scmp.lt.s32.totalorder %s20, 2
          %s159 = scalar_select %p158, %s20, 2
          %s160 = smul.addr %s157, 3
          %s161 = sadd.s32 %s159, %s160
          %s162 = scalar_lea.vmem %s1, %s161
        $region24: #{tpu_custom_call.1} parent=19 // pred_fallthru
          _
        // Predicated region
        $region25: #{tpu_custom_call.1} parent=19 // pred_check
          %p163 = pneg %p97
        $region26: #{tpu_custom_call.1} parent=19 // pred_check_branch
          %165 = sbr.rel (%p163) target = $region28
        $region27: #{tpu_custom_call.1} parent=19 // pred_region
          %s166 = sadd.s32 %s20, 1
          %p167 = scmp.lt.s32.totalorder %s19, 1
          %s168 = scalar_select %p167, %s19, 1
          %p169 = scmp.lt.s32.totalorder %s166, 2
          %s170 = scalar_select %p169, %s166, 2
          %s171 = smul.addr %s168, 3
          %s172 = sadd.s32 %s170, %s171
          %s173 = scalar_lea.vmem %s2, %s172
          %s174 = sadd.s32 %s20, 1
        $region28: #{tpu_custom_call.1} parent=19 // pred_fallthru
          _
      $region20: #{tpu_custom_call.1} parent=5 // pred_fallthru
        _
      %p175 = scmp.le.s32.totalorder 1, %s12
      %p176 = scmp.lt.s32.totalorder %s12, 5
      %p177 = pnand %p175, %p176
      %p178 = pneg %p177
      // Predicated region
      $region29: #{tpu_custom_call.1} parent=5 // pred_check
        _
      $region30: #{tpu_custom_call.1} parent=5 // pred_check_branch
        %180 = sbr.rel (%p177) target = $region32
      $region31: #{tpu_custom_call.1} parent=5 // pred_region
        %s181 = ssub.s32 %s12, 1
        %p182 = pneg %p45
        %p183 = pneg %p42
        %p184 = scmp.lt.s32.totalorder %s21, 1
        %s185 = scalar_select %p184, %s21, 1
        %p186 = scmp.lt.s32.totalorder %s22, 2
        %s187 = scalar_select %p186, %s22, 2
        %s188 = smul.addr %s185, 3
        %s189 = sadd.s32 %s187, %s188
        %s190 = scalar_lea.vmem %s1, %s189
        %p191 = pneg %p73
        %p192 = pneg %p70
        %s193 = sadd.s32 %s22, 1
        %p194 = scmp.lt.s32.totalorder %s21, 1
        %s195 = scalar_select %p194, %s21, 1
        %p196 = scmp.lt.s32.totalorder %s193, 2
        %s197 = scalar_select %p196, %s193, 2
        %s198 = smul.addr %s195, 3
        %s199 = sadd.s32 %s197, %s198
        %s200 = scalar_lea.vmem %s2, %s199
        %p201 = pneg %p103
        %p202 = pneg %p100
        %p203 = pneg %p131
        %p204 = pneg %p128
        %s205 = sand.u32 %s118, 1
        %s206 = scalar_lea.sflag [#allocation3], %s205
        %s207 = sand.u32 %s118, 1
        %s208 = smul.addr %s207, 32
        %s209 = scalar_lea.vmem [#allocation2], %s208
        %p210 = scmp.lt.s32.totalorder %s21, 1
        %s211 = scalar_select %p210, %s21, 1
        %p212 = scmp.lt.s32.totalorder %s22, 2
        %s213 = scalar_select %p212, %s22, 2
        %s214 = smul.addr %s211, 3
        %s215 = sadd.s32 %s213, %s214
        %s216 = scalar_lea.vmem %s1, %s215
        %s217 = sadd.s32 %s22, 1
        %p218 = scmp.lt.s32.totalorder %s21, 1
        %s219 = scalar_select %p218, %s21, 1
        %p220 = scmp.lt.s32.totalorder %s217, 2
        %s221 = scalar_select %p220, %s217, 2
        %s222 = smul.addr %s219, 3
        %s223 = sadd.s32 %s221, %s222
        %s224 = scalar_lea.vmem %s2, %s223
        %s225 = sadd.s32 %s22, 1
        %v226 = vld [vmem:[%s216] sm:$0x1]
        %v227 = vld [vmem:[%s224] sm:$0x1]
        %v230 = vrot.slane %v226, 7
        %v231 = vrot.slane %v227, 7
        %232 = vrot.lane.b32.xlu0 %v230, 127
        %v233 = vpop.permute.xlu0 %232
        %234 = vrot.lane.b32.xlu0 %v231, 127
        %v235 = vpop.permute.xlu0 %234
        %vm236 = vcmask 1039360
        %v237 = vsel %vm236, %v233, %v235
        %v239 = vrot.slane %v226, 6
        %v240 = vrot.slane %v227, 6
        %241 = vrot.lane.b32.xlu0 %v239, 126
        %v242 = vpop.permute.xlu0 %241
        %243 = vrot.lane.b32.xlu0 %v240, 126
        %v244 = vpop.permute.xlu0 %243
        %vm245 = vcmask 1031168
        %v246 = vsel %vm245, %v242, %v244
        %v248 = vrot.slane %v226, 5
        %v249 = vrot.slane %v227, 5
        %250 = vrot.lane.b32.xlu0 %v248, 125
        %v251 = vpop.permute.xlu0 %250
        %252 = vrot.lane.b32.xlu0 %v249, 125
        %v253 = vpop.permute.xlu0 %252
        %vm254 = vcmask 1022976
        %v255 = vsel %vm254, %v251, %v253
        %v257 = vrot.slane %v226, 4
        %v258 = vrot.slane %v227, 4
        %259 = vrot.lane.b32.xlu0 %v257, 124
        %v260 = vpop.permute.xlu0 %259
        %261 = vrot.lane.b32.xlu0 %v258, 124
        %v262 = vpop.permute.xlu0 %261
        %vm263 = vcmask 1014784
        %v264 = vsel %vm263, %v260, %v262
        %v266 = vrot.slane %v226, 3
        %v267 = vrot.slane %v227, 3
        %268 = vrot.lane.b32.xlu0 %v266, 123
        %v269 = vpop.permute.xlu0 %268
        %270 = vrot.lane.b32.xlu0 %v267, 123
        %v271 = vpop.permute.xlu0 %270
        %vm272 = vcmask 1006592
        %v273 = vsel %vm272, %v269, %v271
        %v275 = vrot.slane %v226, 2
        %v276 = vrot.slane %v227, 2
        %277 = vrot.lane.b32.xlu0 %v275, 122
        %v278 = vpop.permute.xlu0 %277
        %279 = vrot.lane.b32.xlu0 %v276, 122
        %v280 = vpop.permute.xlu0 %279
        %vm281 = vcmask 998400
        %v282 = vsel %vm281, %v278, %v280
        %v284 = vrot.slane %v226, 1
        %v285 = vrot.slane %v227, 1
        %286 = vrot.lane.b32.xlu0 %v284, 121
        %v287 = vpop.permute.xlu0 %286
        %288 = vrot.lane.b32.xlu0 %v285, 121
        %v289 = vpop.permute.xlu0 %288
        %vm290 = vcmask 990208
        %v291 = vsel %vm290, %v287, %v289
        %293 = vrot.lane.b32.xlu0 %v226, 120
        %v294 = vpop.permute.xlu0 %293
        %295 = vrot.lane.b32.xlu0 %v227, 120
        %v296 = vpop.permute.xlu0 %295
        %vm297 = vcmask 982016
        %v298 = vsel %vm297, %v294, %v296
        %300 = vrot.lane.b32.xlu0 %v230, 119
        %v301 = vpop.permute.xlu0 %300
        %302 = vrot.lane.b32.xlu0 %v231, 119
        %v303 = vpop.permute.xlu0 %302
        %vm304 = vcmask 973824
        %v305 = vsel %vm304, %v301, %v303
        %307 = vrot.lane.b32.xlu0 %v239, 118
        %v308 = vpop.permute.xlu0 %307
        %309 = vrot.lane.b32.xlu0 %v240, 118
        %v310 = vpop.permute.xlu0 %309
        %vm311 = vcmask 965632
        %v312 = vsel %vm311, %v308, %v310
        %314 = vrot.lane.b32.xlu0 %v248, 117
        %v315 = vpop.permute.xlu0 %314
        %316 = vrot.lane.b32.xlu0 %v249, 117
        %v317 = vpop.permute.xlu0 %316
        %vm318 = vcmask 957440
        %v319 = vsel %vm318, %v315, %v317
        %321 = vrot.lane.b32.xlu0 %v257, 116
        %v322 = vpop.permute.xlu0 %321
        %323 = vrot.lane.b32.xlu0 %v258, 116
        %v324 = vpop.permute.xlu0 %323
        %vm325 = vcmask 949248
        %v326 = vsel %vm325, %v322, %v324
        %328 = vrot.lane.b32.xlu0 %v266, 115
        %v329 = vpop.permute.xlu0 %328
        %330 = vrot.lane.b32.xlu0 %v267, 115
        %v331 = vpop.permute.xlu0 %330
        %vm332 = vcmask 941056
        %v333 = vsel %vm332, %v329, %v331
        %335 = vrot.lane.b32.xlu0 %v275, 114
        %v336 = vpop.permute.xlu0 %335
        %337 = vrot.lane.b32.xlu0 %v276, 114
        %v338 = vpop.permute.xlu0 %337
        %vm339 = vcmask 932864
        %v340 = vsel %vm339, %v336, %v338
        %342 = vrot.lane.b32.xlu0 %v284, 113
        %v343 = vpop.permute.xlu0 %342
        %344 = vrot.lane.b32.xlu0 %v285, 113
        %v345 = vpop.permute.xlu0 %344
        %vm346 = vcmask 924672
        %v347 = vsel %vm346, %v343, %v345
        %vm349 = vcmask 1040384
        %v350 = vsel %vm349, %v226, %v237
        %vm351 = vcmask 1041408
        %v352 = vsel %vm351, %v350, %v246
        %vm353 = vcmask 1042432
        %v354 = vsel %vm353, %v352, %v255
        %vm355 = vcmask 1043456
        %v356 = vsel %vm355, %v354, %v264
        %vm357 = vcmask 1044480
        %v358 = vsel %vm357, %v356, %v273
        %vm359 = vcmask 1045504
        %v360 = vsel %vm359, %v358, %v282
        %vm361 = vcmask 1046528
        %v362 = vsel %vm361, %v360, %v291
        %v363 = vsel %vm349, %v298, %v305
        %v364 = vsel %vm351, %v363, %v312
        %v365 = vsel %vm353, %v364, %v319
        %v366 = vsel %vm355, %v365, %v326
        %v367 = vsel %vm357, %v366, %v333
        %v368 = vsel %vm359, %v367, %v340
        %v369 = vsel %vm361, %v368, %v347
        %v377 = vsel %vm349, %v227, %v235
        %v378 = vsel %vm351, %v377, %v244
        %v379 = vsel %vm353, %v378, %v253
        %v380 = vsel %vm355, %v379, %v262
        %v381 = vsel %vm357, %v380, %v271
        %v382 = vsel %vm359, %v381, %v280
        %v383 = vsel %vm361, %v382, %v289
        %386 = vrot.lane.b32.xlu0 %v362, 112
        %v387 = vpop.permute.xlu0 %386
        %388 = vrot.lane.b32.xlu0 %v383, 112
        %v389 = vpop.permute.xlu0 %388
        %vm390 = vcmask 916480
        %v391 = vsel %vm390, %v387, %v389
        %v393 = vld [vmem:[%s0] sm:$0xff]
        %v394 = vld [vmem:[%s0 + $0x8] sm:$0xff]
        %v395 = vld [vmem:[%s0 + $0x10] sm:$0xff]
        %v396 = vld [vmem:[%s0 + $0x18] sm:$0xff]
        %vm397 = vcmask 195584
        %v399 = vsel %vm397, %v393, 0
        %v402 = vsel %vm397, %v394, 0
        %v405 = vsel %vm397, %v395, 0
        %v408 = vsel %vm397, %v396, 0
        %410 = vmatprep.subr.mxu0 0.0
        %411 = vmatpush1.msra.mxu0 %v362
        %412 = vmatprep.subr.mxu0 0.0
        %413 = vmatpush1.msra.mxu0 %v369
        %414 = vmatprep.subr.mxu0 0.0
        %415 = vmatpush1.msra.mxu0 %v391
        %416 = vmatprep.subr.mxu0 0.0
        %417 = vmatpush1.msra.mxu0 0.0
        %418 = vmatprep.subr.mxu0 0.0
        %419 = vmatpush1.msra.mxu0 0.0
        %420 = vmatprep.subr.mxu0 0.0
        %421 = vmatpush1.msra.mxu0 0.0
        %422 = vmatprep.subr.mxu0 0.0
        %423 = vmatpush1.msra.mxu0 0.0
        %424 = vmatprep.subr.mxu0 0.0
        %425 = vmatpush1.msra.mxu0 0.0
        %426 = vmatprep.subr.mxu0 0.0
        %427 = vmatpush1.msra.mxu0 0.0
        %428 = vmatprep.subr.mxu0 0.0
        %429 = vmatpush1.msra.mxu0 0.0
        %430 = vmatprep.subr.mxu0 0.0
        %431 = vmatpush1.msra.mxu0 0.0
        %432 = vmatprep.subr.mxu0 0.0
        %433 = vmatpush1.msra.mxu0 0.0
        %434 = vmatprep.subr.mxu0 0.0
        %435 = vmatpush1.msra.mxu0 0.0
        %436 = vmatprep.subr.mxu0 0.0
        %437 = vmatpush1.msra.mxu0 0.0
        %438 = vmatprep.subr.mxu0 0.0
        %439 = vmatpush1.msra.mxu0 0.0
        %440 = vmatprep.subr.mxu0 0.0
        %441 = vmatpush1.msra.mxu0 0.0
        %442 = vmatprep.subr.mxu0 0.0
        %443 = vmatpush1.msra.mxu0 0.0
        %444 = vmatprep.subr.mxu0 0.0
        %445 = vmatpush1.msra.mxu0 0.0
        %446 = vmatprep.subr.mxu0 0.0
        %447 = vmatpush1.msra.mxu0 0.0
        %448 = vmatprep.subr.mxu0 0.0
        %449 = vmatpush1.msra.mxu0 0.0
        %450 = vmatprep.subr.mxu0 0.0
        %451 = vmatpush1.msra.mxu0 0.0
        %452 = vmatprep.subr.mxu0 0.0
        %453 = vmatpush1.msra.mxu0 0.0
        %454 = vmatprep.subr.mxu0 0.0
        %455 = vmatpush1.msra.mxu0 0.0
        %456 = vmatprep.subr.mxu0 0.0
        %457 = vmatpush1.msra.mxu0 0.0
        %458 = vmatprep.subr.mxu0 0.0
        %459 = vmatpush1.msra.mxu0 0.0
        %460 = vmatprep.subr.mxu0 0.0
        %461 = vmatpush1.msra.mxu0 0.0
        %462 = vmatprep.subr.mxu0 0.0
        %463 = vmatpush1.msra.mxu0 0.0
        %464 = vmatprep.subr.mxu0 0.0
        %465 = vmatpush1.msra.mxu0 0.0
        %466 = vmatprep.subr.mxu0 0.0
        %467 = vmatpush1.msra.mxu0 0.0
        %468 = vmatprep.subr.mxu0 0.0
        %469 = vmatpush1.msra.mxu0 0.0
        %470 = vmatprep.subr.mxu0 0.0
        %471 = vmatpush1.msra.mxu0 0.0
        %472 = vmatprep.subr.mxu0 0.0
        %473 = vmatpush1.msra.mxu0 0.0
        %474 = vmatprep.mubr.f32.mxu0 0.0
        %475 = vmatmul.mubr.f32.gmra.mrb[0].mxu0 %v399
        %v476 = vpop.f32.mrb[0].mxu0
        %v477 = vadd.f32 0.0, %v476
        %v478 = vpop.f32.mrb[0].mxu0
        %479 = vmatprep.mubr.f32.mxu0 0.0
        %480 = vmatmul.mubr.f32.gmra.mrb[0].mxu0 %v402
        %v481 = vpop.f32.mrb[0].mxu0
        %v482 = vadd.f32 0.0, %v481
        %v483 = vpop.f32.mrb[0].mxu0
        %484 = vmatprep.mubr.f32.mxu0 0.0
        %485 = vmatmul.mubr.f32.gmra.mrb[0].mxu0 %v405
        %v486 = vpop.f32.mrb[0].mxu0
        %v487 = vadd.f32 0.0, %v486
        %v488 = vpop.f32.mrb[0].mxu0
        %489 = vmatprep.mubr.f32.mxu0 0.0
        %490 = vmatmul.mubr.f32.gmra.mrb[0].mxu0 %v408
        %v491 = vpop.f32.mrb[0].mxu0
        %v492 = vadd.f32 0.0, %v491
        %v493 = vpop.f32.mrb[0].mxu0
        %494 = vdwg.mxu0
        %495 = vst [vmem:[%s209] sm:$0xff] %v477
        %496 = vst [vmem:[%s209 + $0x8] sm:$0xff] %v482
        %497 = vst [vmem:[%s209 + $0x10] sm:$0xff] %v487
        %498 = vst [vmem:[%s209 + $0x18] sm:$0xff] %v492
        %s499 = sand.u32 %s118, 1
        %s500 = scalar_lea.sflag [#allocation3], %s499
        %s501 = sand.u32 %s118, 1
        %s502 = smul.addr %s501, 32
        %s503 = scalar_lea.vmem [#allocation2], %s502
        // Predicated region
        $region33: #{tpu_custom_call.1} parent=31 // pred_check
          %p504 = pneg %p128
        $region34: #{tpu_custom_call.1} parent=31 // pred_check_branch
          %506 = sbr.rel (%p504) target = $region36
        $region35: #{tpu_custom_call.1} parent=31 // pred_region
          %s508 = ssub.s32 512, 512
          %509 = vsyncadd %s500, %s508
          %s510 = smul.addr %s21, 8
          %s511 = sadd.s32 %s22, %s510
          %s512 = smul.addr %s511, 128
          %s513 = scalar_lea.hbm %s3, %s512
          %s514 = sshll.u32 %s503, 4
          %s515 = int_to_ptr.vmem [resolvable:$true] %s514
          %520 = dma.vmem_to_hbm [thread:$0]  %s515, 512, %s513, %s500, 128, 256, 8
        $region36: #{tpu_custom_call.1} parent=31 // pred_fallthru
          _
      $region32: #{tpu_custom_call.1} parent=5 // pred_fallthru
        _
      %p521 = scmp.le.s32.totalorder 2, %s12
      // Predicated region
      $region37: #{tpu_custom_call.1} parent=5 // pred_check
        %p522 = pneg %p521
      $region38: #{tpu_custom_call.1} parent=5 // pred_check_branch
        %524 = sbr.rel (%p522) target = $region40
      $region39: #{tpu_custom_call.1} parent=5 // pred_region
        %s525 = ssub.s32 %s12, 2
        // Predicated region
        $region41: #{tpu_custom_call.1} parent=39 // pred_check
          %p526 = pneg %p134
        $region42: #{tpu_custom_call.1} parent=39 // pred_check_branch
          %528 = sbr.rel (%p526) target = $region44
        $region43: #{tpu_custom_call.1} parent=39 // pred_region
          %s529 = sand.u32 %s119, 1
          %s530 = scalar_lea.sflag [#allocation3], %s529
          %s531 = sand.u32 %s119, 1
          %s532 = smul.addr %s531, 32
          %s533 = scalar_lea.vmem [#allocation2], %s532
          %534 = dma.done %s530, 512
        $region44: #{tpu_custom_call.1} parent=39 // pred_fallthru
          _
      $region40: #{tpu_custom_call.1} parent=5 // pred_fallthru
        _
    $region6: #{tpu_custom_call.1} parent=1 // loop_footer
      %s16 = sadd.s32 1, %s12
    $region7: #{tpu_custom_call.1} parent=1 // loop_footer_branch
      %11 = sbr.rel target = $region3
    $region8: #{tpu_custom_call.1} parent=1 // loop_exit
      _
    %535 = vsyncpa [#allocation3], 1
    %s536 = scalar_lea.sflag [#allocation3], 1
    %537 = vsyncpa %s536, 1

</llo_original>
